<compile_context>
chip_gen: v5e
topology: v5e:2x2
jax: 0.10.0
libtpu: 0.0.40
codegen_flags: <defaults>
</compile_context>

<pallas_src>
import jax
import jax.numpy as jnp
from jax.experimental import pallas as pl
from jax.experimental.pallas import tpu as pltpu

batch_size = 5
hidden_size = 2
input_size = 4


def rnn_cell_kernel(x_ref, w_ih_t_ref, o_ref):
    # x:      (B, K) f32
    # w_ih_t: (K, H) f32   (transposed once at parameter-prep time)
    # o:      (B, H) f32
    # Single MXU contraction with f32 accumulation, fused with tanh.
    acc = jnp.dot(x_ref[...], w_ih_t_ref[...],
                  preferred_element_type=jnp.float32)
    o_ref[...] = jnp.tanh(acc).astype(o_ref.dtype)


def prepare_params(w_ih):
    """One-time parameter prep (outside the per-call forward).

    w_ih: (hidden, input) -> w_ih_t: (input, hidden), so the kernel runs a
    plain x @ w_ih_t with no in-kernel transpose.  w_hh is mathematically dead
    in this module (h_prev is always zeros) and is not shipped to the kernel.
    """
    return jnp.transpose(jnp.asarray(w_ih, dtype=jnp.float32))


@jax.jit
def rnn_cell_forward(x, w_ih_t):
    """x: (B, input_size) f32; w_ih_t: (input_size, hidden) f32 -> (B, hidden)."""
    b = x.shape[0]
    hid = w_ih_t.shape[1]
    return pl.pallas_call(
        rnn_cell_kernel,
        out_shape=jax.ShapeDtypeStruct((b, hid), x.dtype),
        # Grid-less: one invocation, all operands fully VMEM-resident.
        in_specs=[
            pl.BlockSpec(memory_space=pltpu.MemorySpace.VMEM),
            pl.BlockSpec(memory_space=pltpu.MemorySpace.VMEM),
        ],
        out_specs=pl.BlockSpec(memory_space=pltpu.MemorySpace.VMEM),
    )(x, w_ih_t)


if __name__ == "__main__":
    key = jax.random.PRNGKey(0)
    kx, kih, khh = jax.random.split(key, 3)

    # Deterministic synthetic tensors at the module's shapes.
    x = jax.random.normal(kx, (batch_size, input_size), dtype=jnp.float32)
    w_ih = jax.random.normal(kih, (hidden_size, input_size), dtype=jnp.float32)
    # w_hh exists in the module but is mathematically dead (h_prev == 0).
    w_hh = jax.random.normal(khh, (hidden_size, hidden_size), dtype=jnp.float32)

    w_ih_t = prepare_params(w_ih)          # transpose once, outside the forward
    h = rnn_cell_forward(x, w_ih_t)
    h = jax.block_until_ready(h)

    # Reference check: the full original formula (h_prev is zeros by construction).
    h_prev = jnp.zeros((batch_size, hidden_size), dtype=jnp.float32)
    ref = jnp.tanh(x @ w_ih.T + h_prev @ w_hh.T)
    assert h.shape == (batch_size, hidden_size)
    assert jnp.allclose(h, ref, atol=1e-5, rtol=1e-5)

    print("KERNEL_OK")
</pallas_src>

<mosaic_0001>
module attributes {stable_mosaic.version = 11 : i64} {
  func.func @rnn_cell_kernel(%arg0: memref<5x4xf32, #tpu.memory_space<vmem>>, %arg1: memref<4x2xf32, #tpu.memory_space<vmem>>, %arg2: memref<5x2xf32, #tpu.memory_space<vmem>>) attributes {dimension_semantics = [], scalar_prefetch = 0 : i64, scratch_operands = 0 : i64, tpu.core_type = #tpu.core_type<tc>} {
    %c0 = arith.constant 0 : index
    %c0_0 = arith.constant 0 : index
    %0 = vector.load %arg0[%c0, %c0_0] : memref<5x4xf32, #tpu.memory_space<vmem>>, vector<5x4xf32>
    %c0_1 = arith.constant 0 : index
    %c0_2 = arith.constant 0 : index
    %1 = vector.load %arg1[%c0_1, %c0_2] : memref<4x2xf32, #tpu.memory_space<vmem>>, vector<4x2xf32>
    %cst = arith.constant dense<0.000000e+00> : vector<5x2xf32>
    %2 = tpu.matmul %0, %1, %cst {dimension_numbers = #tpu.dot_dimension_numbers<[1], [0], [0], [1], [0, 0, 1, 1], [], []>} : vector<5x4xf32>, vector<4x2xf32>, vector<5x2xf32> -> vector<5x2xf32>
    %3 = math.tanh %2 : vector<5x2xf32>
    %c0_3 = arith.constant 0 : index
    %c0_4 = arith.constant 0 : index
    %4 = vector.load %arg2[%c0_3, %c0_4] : memref<5x2xf32, #tpu.memory_space<vmem>>, vector<5x2xf32>
    tpu.vector_store %arg2[%c0_3, %c0_4], %3 {strides = array<i32>} : memref<5x2xf32, #tpu.memory_space<vmem>>, vector<5x2xf32>,
    return
  }
}

</mosaic_0001>

<llo_original>
// kernel: rnn_cell_forward.1
$region0: #{rnn_cell_forward.1}
  #allocation0 [shape = 'u32[]', space=smem, size = 0x4, offset = 0x4, fixed_abs, tag = 'smem constant byte address 0x4 - core index']
  #allocation1 [shape = 'u32[72,128]{1,0:T(1,128)}', space=vmem, size = 0x9000, scoped, tag = 'internal scratch']
  %s0 = inlined_call_operand.vmem [shape: f32[5,4], index: 0, kind: input, shape index: {}]
  %s1 = inlined_call_operand.vmem [shape: f32[4,2], index: 1, kind: input, shape index: {}]
  %s2 = inlined_call_operand.vmem [shape: f32[5,2], index: 2, kind: output, shape index: {}]
  %s3 = sld [smem:[#allocation0]]
  $region18: #{rnn_cell_forward.1} parent=0
    _
  %s5 = ssub.s32 1, %s3
  %s6 = scalar_select 0, %s5, %s3
  // Predicated region
  $region2: #{rnn_cell_forward.1} parent=0 // pred_check
    _
  $region3: #{rnn_cell_forward.1} parent=0 // pred_check_branch
    %8 = sbr.rel (0) target = $region5
  $region4: #{rnn_cell_forward.1} parent=0 // pred_region
    _
  $region5: #{rnn_cell_forward.1} parent=0 // pred_fallthru
    _
  // Predicated region
  $region6: #{rnn_cell_forward.1} parent=0 // pred_check
    _
  $region7: #{rnn_cell_forward.1} parent=0 // pred_check_branch
    %10 = sbr.rel (0) target = $region9
  $region8: #{rnn_cell_forward.1} parent=0 // pred_region
    _
  $region9: #{rnn_cell_forward.1} parent=0 // pred_fallthru
    _
  %v11 = vld [vmem:[%s0] sm:$0x1f]
  %v12 = vld [vmem:[%s1] sm:$0xf]
  %vm13 = vcmask 31744
  %v15 = vsel %vm13, %v11, 0
  %vm17 = vcmask 1043456
  %v19 = vsel %vm17, %v12, 0
  %21 = vmatpush.msra.mxu0 0.0
  %22 = vmatpush.msra.mxu0 0.0
  %23 = vmatpush.msra.mxu0 0.0
  %24 = vmatpush.msra.mxu0 0.0
  %25 = vmatpush.msra.mxu0 0.0
  %26 = vmatpush.msra.mxu0 0.0
  %27 = vmatpush.msra.mxu0 0.0
  %28 = vmatpush.msra.mxu0 0.0
  %29 = vmatpush.msra.mxu0 0.0
  %30 = vmatpush.msra.mxu0 0.0
  %31 = vmatpush.msra.mxu0 0.0
  %32 = vmatpush.msra.mxu0 0.0
  %33 = vmatpush.msra.mxu0 0.0
  %34 = vmatpush.msra.mxu0 0.0
  %35 = vmatpush.msra.mxu0 0.0
  %36 = vmatpush.msra.mxu0 %v19
  %37 = vmatmul.f32.gmra.mxu0 %v15
  %v38 = vpop.f32.mrf.mxu0
  %v39 = vadd.f32 0.0, %v38
  %40 = vdwg.mxu0
  %v41 = vtanh.pop %v39
  %vm42 = vcmask 12288
  %43 = vst.msk [vmem:[%s2] sm:$0x1f] %vm42, %v41
  // Predicated region
  $region10: #{rnn_cell_forward.1} parent=0 // pred_check
    _
  $region11: #{rnn_cell_forward.1} parent=0 // pred_check_branch
    %45 = sbr.rel (0) target = $region13
  $region12: #{rnn_cell_forward.1} parent=0 // pred_region
    _
  $region13: #{rnn_cell_forward.1} parent=0 // pred_fallthru
    _
  // Predicated region
  $region14: #{rnn_cell_forward.1} parent=0 // pred_check
    _
  $region15: #{rnn_cell_forward.1} parent=0 // pred_check_branch
    %47 = sbr.rel (0) target = $region17
  $region16: #{rnn_cell_forward.1} parent=0 // pred_region
    _
  $region17: #{rnn_cell_forward.1} parent=0 // pred_fallthru
    _

</llo_original>
